<compile_context>
chip_gen: v7x
topology: tpu7x:2x2x1
jax: 0.10.0
libtpu: 0.0.40
codegen_flags: <defaults>
</compile_context>

<pallas_src>
import functools

import jax
import jax.numpy as jnp
from jax.experimental import pallas as pl
from jax.experimental.pallas import tpu as pltpu


def _attention_kernel(qk_ref, v_ref, w_ref, b_ref, o_ref, *, sq: int):
    """qk_ref: (Bt, Sq+Sk, D) concatenated [query; key].
    w_ref: (D, 2D) = [Wq^T | Wk^T].  b_ref: (1, 2D) = [bq | bk].  v_ref: (Bt, Sk, Dv)."""
    Bt, S, D = qk_ref.shape
    Dv = v_ref.shape[-1]
    D2 = w_ref.shape[-1]          # 2 * D

    # ---- Fused Q/K Linear projection: one (Bt*S, D) x (D, 2D) MXU matmul.
    # Collapsing leading dims keeps the minor dim untouched (free relayout). The few
    # duplicated FLOPs (query rows also hit Wk^T and vice versa) are irrelevant at this size.
    x = qk_ref[...].reshape(Bt * S, D)
    proj = jnp.dot(x, w_ref[...], preferred_element_type=jnp.float32) + b_ref[...]
    proj = proj.reshape(Bt, S, D2)

    q = proj[:, :sq, :D]          # query rows, Wq^T columns  -> (Bt, Sq, D)
    k = proj[:, sq:, D:]          # key rows,   Wk^T columns  -> (Bt, Sk, D)

    # scores = q @ k^T, contracting the last axes (no materialized transpose of k).
    # No 1/sqrt(d) scaling — matches the reference module.
    scores = jnp.einsum("bqd,bkd->bqk", q, k, preferred_element_type=jnp.float32)

    # Numerically-stable softmax over the key axis (exact divide — see header note).
    m = jnp.max(scores, axis=-1, keepdims=True)
    e = jnp.exp(scores - m)
    denom = jnp.sum(e, axis=-1, keepdims=True)
    weights = e / denom

    # output = weights @ value (batched).
    out = jnp.einsum("bqk,bkd->bqd", weights, v_ref[...],
                     preferred_element_type=jnp.float32)
    o_ref[...] = out.astype(o_ref.dtype)


def simple_attention(query, key, value, wq, bq, wk, bk, *, batch_block=512):
    """query: (B, Sq, D), key: (B, Sk, D), value: (B, Sk, Dv).
    wq, wk: (D, D) stored (out_features, in_features) like nn.Linear; bq, bk: (D,)."""
    B, Sq, D = query.shape
    _, Sk, _ = key.shape
    Dv = value.shape[-1]
    S = Sq + Sk

    # Wrapper-side fusion (one-time XLA concats): inputs along sequence, weights along
    # out-features, biases along features. Weights pre-transposed so the kernel never does.
    qk = jnp.concatenate([query, key], axis=1)                  # (B, Sq+Sk, D)
    w_fused = jnp.concatenate([wq.T, wk.T], axis=1)             # (D, 2D) = [Wq^T | Wk^T]
    b_fused = jnp.concatenate([bq, bk]).reshape(1, 2 * D)       # (1, 2D)

    # ---- Batch-block selection.
    # Per-batch-element VMEM footprint (inputs + output + main temporaries), double-buffered.
    itemsize = 4
    per_b = itemsize * (3 * S * D + Sk * Dv + Sq * Dv + 2 * Sq * Sk)
    vmem_budget = 10 * 1024 * 1024          # conservative: fits v5e's 16 MiB scoped default
    bt_cap = max(1, vmem_budget // (2 * per_b))
    Bt = max(1, min(batch_block, bt_cap, B))
    if B >= 2:
        # Guarantee >= 2 grid steps so the parallel batch axis can shard across
        # v7x's two TensorCores (negligible extra per-step cost on v5e/v6e).
        Bt = min(Bt, -(-B // 2))
    nb = pl.cdiv(B, Bt)
    Bp = nb * Bt
    if Bp != B:
        pad = ((0, Bp - B), (0, 0), (0, 0))
        qk = jnp.pad(qk, pad)
        value = jnp.pad(value, pad)

    flops = 2 * Bp * (S * D * 2 * D + Sq * Sk * D + Sq * Sk * Dv)
    transcendentals = Bp * Sq * Sk
    bytes_accessed = itemsize * (Bp * S * D + Bp * Sk * Dv + Bp * Sq * Dv
                                 + 2 * D * D + 2 * D)

    kernel = functools.partial(_attention_kernel, sq=Sq)

    out = pl.pallas_call(
        kernel,
        out_shape=jax.ShapeDtypeStruct((Bp, Sq, Dv), query.dtype),
        grid_spec=pltpu.PrefetchScalarGridSpec(
            num_scalar_prefetch=0,
            grid=(nb,),
            in_specs=[
                pl.BlockSpec((Bt, S, D), lambda i: (i, 0, 0)),     # [query; key]
                pl.BlockSpec((Bt, Sk, Dv), lambda i: (i, 0, 0)),   # value
                pl.BlockSpec((D, 2 * D), lambda i: (0, 0)),        # [Wq^T | Wk^T] (step-invariant)
                pl.BlockSpec((1, 2 * D), lambda i: (0, 0)),        # [bq | bk]     (step-invariant)
            ],
            out_specs=pl.BlockSpec((Bt, Sq, Dv), lambda i: (i, 0, 0)),
        ),
        compiler_params=pltpu.CompilerParams(
            dimension_semantics=("parallel",),
            vmem_limit_bytes=32 * 1024 * 1024,   # safe on all gens (v7x physical = 64 MiB)
        ),
        cost_estimate=pl.CostEstimate(
            flops=flops,
            transcendentals=transcendentals,
            bytes_accessed=bytes_accessed,
        ),
    )(qk, value, w_fused, b_fused)

    return out[:B]


def _reference(query, key, value, wq, bq, wk, bk):
    hp = jax.lax.Precision.HIGHEST
    q = jnp.einsum("bsd,od->bso", query, wq, precision=hp) + bq
    k = jnp.einsum("bsd,od->bso", key, wk, precision=hp) + bk
    scores = jnp.einsum("bqd,bkd->bqk", q, k, precision=hp)
    weights = jax.nn.softmax(scores, axis=-1)
    return jnp.einsum("bqk,bkd->bqd", weights, value, precision=hp)


if __name__ == "__main__":
    B, Sq, Sk, D = 2, 8, 8, 32   # key_query_dim = 32
    dtype = jnp.float32

    key0 = jax.random.PRNGKey(0)
    k_q, k_k, k_v, k_wq, k_bq, k_wk, k_bk = jax.random.split(key0, 7)

    query = jax.random.normal(k_q, (B, Sq, D), dtype)
    key_t = jax.random.normal(k_k, (B, Sk, D), dtype)
    value = jax.random.normal(k_v, (B, Sk, D), dtype)

    # Deterministic parameter init, same shapes as nn.Linear(D, D): weight (D, D), bias (D,)
    bound = 1.0 / (D ** 0.5)
    wq = jax.random.uniform(k_wq, (D, D), dtype, -bound, bound)
    bq = jax.random.uniform(k_bq, (D,), dtype, -bound, bound)
    wk = jax.random.uniform(k_wk, (D, D), dtype, -bound, bound)
    bk = jax.random.uniform(k_bk, (D,), dtype, -bound, bound)

    out = simple_attention(query, key_t, value, wq, bq, wk, bk)
    out = jax.block_until_ready(out)

    ref = _reference(query, key_t, value, wq, bq, wk, bk)
    assert out.shape == (B, Sq, D), out.shape
    max_err = float(jnp.max(jnp.abs(out - ref)))
    # f32 (vs torch f64) compute; softmax uses an exact divide, so this is comfortably tight.
    assert jnp.allclose(out, ref, atol=2e-4, rtol=2e-4), max_err

    print("KERNEL_OK")
</pallas_src>

<mosaic_0001>
module attributes {stable_mosaic.version = 11 : i64} {
  func.func @_attention_kernel(%arg0: i32, %arg1: memref<1x16x32xf32, #tpu.memory_space<vmem>>, %arg2: memref<1x8x32xf32, #tpu.memory_space<vmem>>, %arg3: memref<32x64xf32, #tpu.memory_space<vmem>>, %arg4: memref<1x64xf32, #tpu.memory_space<vmem>>, %arg5: memref<1x8x32xf32, #tpu.memory_space<vmem>>) attributes {dimension_semantics = [#tpu.dimension_semantics<parallel>], iteration_bounds = array<i64: 2>, scalar_prefetch = 0 : i64, scratch_operands = 0 : i64, tpu.core_type = #tpu.core_type<tc>, window_params = [{transform_indices = @transform_0, window_bounds = array<i64: 1, 16, 32>}, {transform_indices = @transform_1, window_bounds = array<i64: 1, 8, 32>}, {pipeline_mode = #tpu.pipeline_mode<synchronous>, transform_indices = @transform_2, window_bounds = array<i64: 32, 64>}, {pipeline_mode = #tpu.pipeline_mode<synchronous>, transform_indices = @transform_3, window_bounds = array<i64: 1, 64>}, {transform_indices = @transform_4, window_bounds = array<i64: 1, 8, 32>}]} {
    %c0 = arith.constant 0 : index
    %c0_0 = arith.constant 0 : index
    %c0_1 = arith.constant 0 : index
    %0 = vector.load %arg1[%c0, %c0_0, %c0_1] : memref<1x16x32xf32, #tpu.memory_space<vmem>>, vector<1x16x32xf32>
    %1 = vector.shape_cast %0 : vector<1x16x32xf32> to vector<16x32xf32>
    %c0_2 = arith.constant 0 : index
    %c0_3 = arith.constant 0 : index
    %2 = vector.load %arg3[%c0_2, %c0_3] : memref<32x64xf32, #tpu.memory_space<vmem>>, vector<32x64xf32>
    %cst = arith.constant dense<0.000000e+00> : vector<16x64xf32>
    %3 = tpu.matmul %1, %2, %cst {dimension_numbers = #tpu.dot_dimension_numbers<[1], [0], [0], [1], [0, 0, 1, 1], [], []>} : vector<16x32xf32>, vector<32x64xf32>, vector<16x64xf32> -> vector<16x64xf32>
    %c0_4 = arith.constant 0 : index
    %c0_5 = arith.constant 0 : index
    %4 = vector.load %arg4[%c0_4, %c0_5] : memref<1x64xf32, #tpu.memory_space<vmem>>, vector<1x64xf32>
    %5 = vector.broadcast %4 : vector<1x64xf32> to vector<16x64xf32>
    %6 = arith.addf %3, %5 : vector<16x64xf32>
    %7 = vector.shape_cast %6 : vector<16x64xf32> to vector<1x16x64xf32>
    %8 = vector.extract_strided_slice %7 {offsets = [0, 0, 0], sizes = [1, 8, 32], strides = [1, 1, 1]} : vector<1x16x64xf32> to vector<1x8x32xf32>
    %9 = vector.extract_strided_slice %7 {offsets = [0, 8, 32], sizes = [1, 8, 32], strides = [1, 1, 1]} : vector<1x16x64xf32> to vector<1x8x32xf32>
    "tpu.trace_start"() <{level = 10 : i32, message = "bqd,bkd->bqk"}> : () -> ()
    %cst_6 = arith.constant dense<0.000000e+00> : vector<1x8x8xf32>
    %10 = tpu.matmul %8, %9, %cst_6 {dimension_numbers = #tpu.dot_dimension_numbers<[2], [2], [1], [1], [0, 0, 0, 1, 1, 1], [0], [0]>} : vector<1x8x32xf32>, vector<1x8x32xf32>, vector<1x8x8xf32> -> vector<1x8x8xf32>
    "tpu.trace_stop"() : () -> ()
    %cst_7 = arith.constant dense<0xFF800000> : vector<1x8xf32>
    %11 = vector.multi_reduction <maximumf>, %10, %cst_7 [2] : vector<1x8x8xf32> to vector<1x8xf32>
    %12 = vector.shape_cast %11 : vector<1x8xf32> to vector<1x8x1xf32>
    %13 = vector.broadcast %12 : vector<1x8x1xf32> to vector<1x8x8xf32>
    %14 = arith.subf %10, %13 : vector<1x8x8xf32>
    %15 = math.exp %14 : vector<1x8x8xf32>
    %cst_8 = arith.constant dense<0.000000e+00> : vector<1x8xf32>
    %16 = vector.multi_reduction <add>, %15, %cst_8 [2] : vector<1x8x8xf32> to vector<1x8xf32>
    %17 = vector.shape_cast %16 : vector<1x8xf32> to vector<1x8x1xf32>
    %18 = vector.broadcast %17 : vector<1x8x1xf32> to vector<1x8x8xf32>
    %19 = arith.divf %15, %18 : vector<1x8x8xf32>
    %c0_9 = arith.constant 0 : index
    %c0_10 = arith.constant 0 : index
    %c0_11 = arith.constant 0 : index
    %20 = vector.load %arg2[%c0_9, %c0_10, %c0_11] : memref<1x8x32xf32, #tpu.memory_space<vmem>>, vector<1x8x32xf32>
    "tpu.trace_start"() <{level = 10 : i32, message = "bqk,bkd->bqd"}> : () -> ()
    %cst_12 = arith.constant dense<0.000000e+00> : vector<1x8x32xf32>
    %21 = tpu.matmul %19, %20, %cst_12 {dimension_numbers = #tpu.dot_dimension_numbers<[2], [1], [1], [2], [0, 0, 0, 1, 1, 2], [0], [0]>} : vector<1x8x8xf32>, vector<1x8x32xf32>, vector<1x8x32xf32> -> vector<1x8x32xf32>
    "tpu.trace_stop"() : () -> ()
    %c0_13 = arith.constant 0 : index
    %c0_14 = arith.constant 0 : index
    %c0_15 = arith.constant 0 : index
    %22 = vector.load %arg5[%c0_13, %c0_14, %c0_15] : memref<1x8x32xf32, #tpu.memory_space<vmem>>, vector<1x8x32xf32>
    tpu.vector_store %arg5[%c0_13, %c0_14, %c0_15], %21 {strides = array<i32>} : memref<1x8x32xf32, #tpu.memory_space<vmem>>, vector<1x8x32xf32>,
    return
  }
  func.func @transform_0(%arg0: i32) -> (i32, i32, i32) {
    %c0_i32 = arith.constant 0 : i32
    %c0_i32_0 = arith.constant 0 : i32
    %c0_i32_1 = arith.constant 0 : i32
    return %arg0, %c0_i32, %c0_i32_0 : i32, i32, i32
  }
  func.func @transform_1(%arg0: i32) -> (i32, i32, i32) {
    %c0_i32 = arith.constant 0 : i32
    %c0_i32_0 = arith.constant 0 : i32
    %c0_i32_1 = arith.constant 0 : i32
    return %arg0, %c0_i32, %c0_i32_0 : i32, i32, i32
  }
  func.func @transform_2(%arg0: i32) -> (i32, i32) {
    %c0_i32 = arith.constant 0 : i32
    %c0_i32_0 = arith.constant 0 : i32
    %c0_i32_1 = arith.constant 0 : i32
    return %c0_i32, %c0_i32_0 : i32, i32
  }
  func.func @transform_3(%arg0: i32) -> (i32, i32) {
    %c0_i32 = arith.constant 0 : i32
    %c0_i32_0 = arith.constant 0 : i32
    %c0_i32_1 = arith.constant 0 : i32
    return %c0_i32, %c0_i32_0 : i32, i32
  }
  func.func @transform_4(%arg0: i32) -> (i32, i32, i32) {
    %c0_i32 = arith.constant 0 : i32
    %c0_i32_0 = arith.constant 0 : i32
    %c0_i32_1 = arith.constant 0 : i32
    return %arg0, %c0_i32, %c0_i32_0 : i32, i32, i32
  }
}

</mosaic_0001>

<llo_original>
// kernel: tpu_custom_call.1
$region0: #{tpu_custom_call.1}
  #allocation0 [shape = 'u32[]', space=smem, size = 0x4, offset = 0x4, fixed_abs, tag = 'smem constant byte address 0x4 - core index']
  #allocation1 [shape = 'u32[144,128]{1,0:T(1,128)}', space=vmem, size = 0x12000, scoped, tag = 'internal scratch']
  %s0 = inlined_call_operand.hbm [shape: f32[2,16,32], index: 0, kind: input, shape index: {}]
  %s1 = inlined_call_operand.hbm [shape: f32[2,8,32], index: 1, kind: input, shape index: {}]
  %s2 = inlined_call_operand.hbm [shape: f32[32,64], index: 2, kind: input, shape index: {}]
  %s3 = inlined_call_operand.vmem [shape: f32[1,64], index: 3, kind: input, shape index: {}]
  %s4 = inlined_call_operand.hbm [shape: f32[2,8,32], index: 4, kind: output, shape index: {}]
  %s5 = sld [smem:[#allocation0]]
  $region61: #{tpu_custom_call.1} parent=0
    _
  %s7 = ssub.s32 1, %s5
  %s8 = scalar_select 0, %s7, %s5
  $region1: #{tpu_custom_call.1} parent=0
    #allocation2 [shape = 'u8[16384]{0}', space=vmem, size = 0x4000, scoped, tag = 'input window, operand 0']
    #allocation3 [shape = 's32[2]{0}', space=sflag, size = 0x8, scoped, tag = 'scoped memory for tpu_custom_call.1']
    #allocation4 [shape = 's32[2]{0}', space=sflag, size = 0x8, scoped, tag = 'scoped memory for tpu_custom_call.1']
    #allocation5 [shape = 'u8[8192]{0}', space=vmem, size = 0x2000, scoped, tag = 'input window, operand 1']
    #allocation6 [shape = 's32[2]{0}', space=sflag, size = 0x8, scoped, tag = 'scoped memory for tpu_custom_call.1']
    #allocation7 [shape = 'u8[16384]{0}', space=vmem, size = 0x4000, scoped, tag = 'input window, operand 2, single buffered']
    #allocation8 [shape = 'u8[8192]{0}', space=vmem, size = 0x2000, scoped, tag = 'output window, operand 0']
    %9 = vsyncpa [#allocation3], 0
    %s10 = scalar_lea.sflag [#allocation3], 1
    %11 = vsyncpa %s10, 0
    %12 = vsyncpa [#allocation6], 0
    %s13 = scalar_lea.sflag [#allocation6], 1
    %14 = vsyncpa %s13, 0
    %15 = vsyncpa [#allocation4], 0
    %s16 = scalar_lea.sflag [#allocation4], 1
    %17 = vsyncpa %s16, 0
    loop: start=0, step=1, limit=4
    $region2: #{tpu_custom_call.1} parent=1 // loop_pre_header
      _
    $region3: #{tpu_custom_call.1} parent=1 // loop_header
      %s19 = sphi 0, %s23
      %p20 = scmp.ge.s32.totalorder %s19, 4
      %s29 = sphi 0, %s31
      %s32 = sphi 0, %s29
      %s33 = sphi 0, %s32
      %s49 = sphi 0, %s33
      %s55 = sphi 0, %s57
      %s58 = sphi 0, %s55
      %s59 = sphi 0, %s58
      %s75 = sphi 0, %s59
      %s79 = sphi 0, %s79
      %s81 = sphi 0, %s79
      %s82 = sphi 0, %s81
      %s96 = sphi 0, %s82
      %s100 = sphi 0, %s100
      %s102 = sphi 0, %s100
      %s103 = sphi 0, %s102
      %s117 = sphi 0, %s103
      %s123 = sphi 0, %s125
      %s126 = sphi 0, %s123
      %s127 = sphi 0, %s126
      %s143 = sphi 0, %s127
    $region4: #{tpu_custom_call.1} parent=1 // loop_header_branch
      %22 = sbr.rel (%p20) target = $region8
    $region5: #{tpu_custom_call.1} parent=1 // loop_body
      %s24 = ssub.s32 %s19, 1
      %s25 = ssub.s32 %s19, 2
      %s26 = sadd.s32 %s19, 1
      %s27 = ssub.s32 %s19, %s26
      %p28 = scmp.eq.s32.totalorder %s27, 0
      %s30 = sadd.s32 %s29, 1
      %s31 = scalar_select %p28, %s29, %s30
      %p34 = pneg %p28
      %p35 = scmp.eq.s32.totalorder %s19, 1
      %p36 = por %p34, %p35
      %p37 = scmp.ne.s32.totalorder %s29, %s32
      %p38 = scmp.eq.s32.totalorder %s19, 0
      %p39 = por %p37, %p38
      %p40 = scmp.ne.s32.totalorder %s29, %s32
      %p41 = scmp.eq.s32.totalorder %s24, 1
      %p42 = por %p40, %p41
      %p43 = scmp.ne.s32.totalorder %s32, %s33
      %p44 = scmp.eq.s32.totalorder %s24, 0
      %p45 = por %p43, %p44
      %p46 = scmp.ne.s32.totalorder %s32, %s33
      %p47 = scmp.eq.s32.totalorder %s25, 1
      %p48 = por %p46, %p47
      %p50 = scmp.ne.s32.totalorder %s33, %s49
      %p51 = scmp.eq.s32.totalorder %s25, 0
      %p52 = por %p50, %p51
      %s53 = ssub.s32 %s19, %s26
      %p54 = scmp.eq.s32.totalorder %s53, 0
      %s56 = sadd.s32 %s55, 1
      %s57 = scalar_select %p54, %s55, %s56
      %p60 = pneg %p54
      %p61 = scmp.eq.s32.totalorder %s19, 1
      %p62 = por %p60, %p61
      %p63 = scmp.ne.s32.totalorder %s55, %s58
      %p64 = scmp.eq.s32.totalorder %s19, 0
      %p65 = por %p63, %p64
      %p66 = scmp.ne.s32.totalorder %s55, %s58
      %p67 = scmp.eq.s32.totalorder %s24, 1
      %p68 = por %p66, %p67
      %p69 = scmp.ne.s32.totalorder %s58, %s59
      %p70 = scmp.eq.s32.totalorder %s24, 0
      %p71 = por %p69, %p70
      %p72 = scmp.ne.s32.totalorder %s58, %s59
      %p73 = scmp.eq.s32.totalorder %s25, 1
      %p74 = por %p72, %p73
      %p76 = scmp.ne.s32.totalorder %s59, %s75
      %p77 = scmp.eq.s32.totalorder %s25, 0
      %p78 = por %p76, %p77
      %s80 = sadd.s32 %s79, 1
      %p83 = scmp.eq.s32.totalorder %s19, 1
      %p84 = scmp.ne.s32.totalorder %s79, %s81
      %p85 = scmp.eq.s32.totalorder %s19, 0
      %p86 = por %p84, %p85
      %p87 = scmp.ne.s32.totalorder %s79, %s81
      %p88 = scmp.eq.s32.totalorder %s24, 1
      %p89 = por %p87, %p88
      %p90 = scmp.ne.s32.totalorder %s81, %s82
      %p91 = scmp.eq.s32.totalorder %s24, 0
      %p92 = por %p90, %p91
      %p93 = scmp.ne.s32.totalorder %s81, %s82
      %p94 = scmp.eq.s32.totalorder %s25, 1
      %p95 = por %p93, %p94
      %p97 = scmp.ne.s32.totalorder %s82, %s96
      %p98 = scmp.eq.s32.totalorder %s25, 0
      %p99 = por %p97, %p98
      %s101 = sadd.s32 %s100, 1
      %p104 = scmp.eq.s32.totalorder %s19, 1
      %p105 = scmp.ne.s32.totalorder %s100, %s102
      %p106 = scmp.eq.s32.totalorder %s19, 0
      %p107 = por %p105, %p106
      %p108 = scmp.ne.s32.totalorder %s100, %s102
      %p109 = scmp.eq.s32.totalorder %s24, 1
      %p110 = por %p108, %p109
      %p111 = scmp.ne.s32.totalorder %s102, %s103
      %p112 = scmp.eq.s32.totalorder %s24, 0
      %p113 = por %p111, %p112
      %p114 = scmp.ne.s32.totalorder %s102, %s103
      %p115 = scmp.eq.s32.totalorder %s25, 1
      %p116 = por %p114, %p115
      %p118 = scmp.ne.s32.totalorder %s103, %s117
      %p119 = scmp.eq.s32.totalorder %s25, 0
      %p120 = por %p118, %p119
      %s121 = ssub.s32 %s19, %s26
      %p122 = scmp.eq.s32.totalorder %s121, 0
      %s124 = sadd.s32 %s123, 1
      %s125 = scalar_select %p122, %s123, %s124
      %p128 = pneg %p122
      %p129 = scmp.eq.s32.totalorder %s19, 1
      %p130 = por %p128, %p129
      %p131 = scmp.ne.s32.totalorder %s123, %s126
      %p132 = scmp.eq.s32.totalorder %s19, 0
      %p133 = por %p131, %p132
      %p134 = scmp.ne.s32.totalorder %s123, %s126
      %p135 = scmp.eq.s32.totalorder %s24, 1
      %p136 = por %p134, %p135
      %p137 = scmp.ne.s32.totalorder %s126, %s127
      %p138 = scmp.eq.s32.totalorder %s24, 0
      %p139 = por %p137, %p138
      %p140 = scmp.ne.s32.totalorder %s126, %s127
      %p141 = scmp.eq.s32.totalorder %s25, 1
      %p142 = por %p140, %p141
      %p144 = scmp.ne.s32.totalorder %s127, %s143
      %p145 = scmp.eq.s32.totalorder %s25, 0
      %p146 = por %p144, %p145
      %p147 = scmp.le.s32.totalorder 1, %s19
      %p148 = scmp.lt.s32.totalorder %s19, 3
      %p149 = pnand %p147, %p148
      %p150 = pneg %p149
      // Predicated region
      $region9: #{tpu_custom_call.1} parent=5 // pred_check
        _
      $region10: #{tpu_custom_call.1} parent=5 // pred_check_branch
        %152 = sbr.rel (%p149) target = $region12
      $region11: #{tpu_custom_call.1} parent=5 // pred_region
        %s153 = ssub.s32 %s19, 1
        // Predicated region
        $region13: #{tpu_custom_call.1} parent=11 // pred_check
          %p154 = pneg %p92
        $region14: #{tpu_custom_call.1} parent=11 // pred_check_branch
          %156 = sbr.rel (%p154) target = $region16
        $region15: #{tpu_custom_call.1} parent=11 // pred_region
          %s158 = ssub.s32 512, 512
          %159 = vsyncadd [#allocation6], %s158
          %s160 = sshll.u32 [#allocation7], 4
          %s161 = int_to_ptr.vmem [resolvable:$true] %s160
          %166 = dma.hbm_to_vmem [thread:$0]  %s2, 512, %s161, [#allocation6], 128, 128, 8
        $region16: #{tpu_custom_call.1} parent=11 // pred_fallthru
          _
        // Predicated region
        $region17: #{tpu_custom_call.1} parent=11 // pred_check
          %p167 = pneg %p113
        $region18: #{tpu_custom_call.1} parent=11 // pred_check_branch
          %169 = sbr.rel (%p167) target = $region20
        $region19: #{tpu_custom_call.1} parent=11 // pred_region
          _
        $region20: #{tpu_custom_call.1} parent=11 // pred_fallthru
          _
      $region12: #{tpu_custom_call.1} parent=5 // pred_fallthru
        _
      %p170 = scmp.lt.s32.totalorder %s19, 2
      // Predicated region
      $region21: #{tpu_custom_call.1} parent=5 // pred_check
        %p171 = pneg %p170
      $region22: #{tpu_custom_call.1} parent=5 // pred_check_branch
        %173 = sbr.rel (%p171) target = $region24
      $region23: #{tpu_custom_call.1} parent=5 // pred_region
        // Predicated region
        $region25: #{tpu_custom_call.1} parent=23 // pred_check
          %p174 = pneg %p39
        $region26: #{tpu_custom_call.1} parent=23 // pred_check_branch
          %176 = sbr.rel (%p174) target = $region28
        $region27: #{tpu_custom_call.1} parent=23 // pred_region
          %s177 = sand.u32 %s29, 1
          %s178 = scalar_lea.sflag [#allocation3], %s177
          %s179 = sand.u32 %s29, 1
          %s180 = smul.addr %s179, 16
          %s181 = scalar_lea.vmem [#allocation2], %s180
          %s183 = ssub.s32 256, 256
          %184 = vsyncadd %s178, %s183
          %s185 = smul.addr %s19, 2
          %s186 = smul.addr %s185, 128
          %s187 = scalar_lea.hbm %s0, %s186
          %s188 = sshll.u32 %s181, 4
          %s189 = int_to_ptr.vmem [resolvable:$true] %s188
          %194 = dma.hbm_to_vmem [thread:$0]  %s187, 256, %s189, %s178, 128, 128, 8
        $region28: #{tpu_custom_call.1} parent=23 // pred_fallthru
          _
        // Predicated region
        $region29: #{tpu_custom_call.1} parent=23 // pred_check
          %p195 = pneg %p65
        $region30: #{tpu_custom_call.1} parent=23 // pred_check_branch
          %197 = sbr.rel (%p195) target = $region32
        $region31: #{tpu_custom_call.1} parent=23 // pred_region
          %s198 = sand.u32 %s19, 1
          %s199 = scalar_lea.sflag [#allocation6], %s198
          %s200 = sand.u32 %s55, 1
          %s201 = smul.addr %s200, 8
          %s202 = scalar_lea.vmem [#allocation5], %s201
          %s204 = ssub.s32 128, 128
          %205 = vsyncadd %s199, %s204
          %s206 = smul.addr %s19, 128
          %s207 = scalar_lea.hbm %s1, %s206
          %s209 = sshll.u32 %s202, 4
          %s210 = int_to_ptr.vmem [resolvable:$true] %s209
          %212 = dma.hbm_to_vmem [thread:$0]  %s207, 128, %s210, %s199
        $region32: #{tpu_custom_call.1} parent=23 // pred_fallthru
          _
      $region24: #{tpu_custom_call.1} parent=5 // pred_fallthru
        _
      %p213 = scmp.le.s32.totalorder 1, %s19
      %p214 = scmp.lt.s32.totalorder %s19, 3
      %p215 = pnand %p213, %p214
      %p216 = pneg %p215
      // Predicated region
      $region33: #{tpu_custom_call.1} parent=5 // pred_check
        _
      $region34: #{tpu_custom_call.1} parent=5 // pred_check_branch
        %218 = sbr.rel (%p215) target = $region36
      $region35: #{tpu_custom_call.1} parent=5 // pred_region
        %s219 = ssub.s32 %s19, 1
        %s220 = sand.u32 %s32, 1
        %s221 = scalar_lea.sflag [#allocation3], %s220
        %s222 = sand.u32 %s32, 1
        %s223 = smul.addr %s222, 16
        %s224 = scalar_lea.vmem [#allocation2], %s223
        // Predicated region
        $region37: #{tpu_custom_call.1} parent=35 // pred_check
          %p225 = pneg %p45
        $region38: #{tpu_custom_call.1} parent=35 // pred_check_branch
          %227 = sbr.rel (%p225) target = $region40
        $region39: #{tpu_custom_call.1} parent=35 // pred_region
          %228 = dma.done %s221, 256
        $region40: #{tpu_custom_call.1} parent=35 // pred_fallthru
          _
        %s229 = sand.u32 %s24, 1
        %s230 = scalar_lea.sflag [#allocation6], %s229
        %s231 = sand.u32 %s58, 1
        %s232 = smul.addr %s231, 8
        %s233 = scalar_lea.vmem [#allocation5], %s232
        // Predicated region
        $region41: #{tpu_custom_call.1} parent=35 // pred_check
          %p234 = pneg %p71
        $region42: #{tpu_custom_call.1} parent=35 // pred_check_branch
          %236 = sbr.rel (%p234) target = $region44
        $region43: #{tpu_custom_call.1} parent=35 // pred_region
          %237 = dma.done %s230, 128
        $region44: #{tpu_custom_call.1} parent=35 // pred_fallthru
          _
        // Predicated region
        $region45: #{tpu_custom_call.1} parent=35 // pred_check
          %p238 = pneg %p92
        $region46: #{tpu_custom_call.1} parent=35 // pred_check_branch
          %240 = sbr.rel (%p238) target = $region48
        $region47: #{tpu_custom_call.1} parent=35 // pred_region
          %241 = dma.done [#allocation6], 512
        $region48: #{tpu_custom_call.1} parent=35 // pred_fallthru
          _
        %s242 = sand.u32 %s32, 1
        %s243 = scalar_lea.sflag [#allocation3], %s242
        %s244 = sand.u32 %s32, 1
        %s245 = smul.addr %s244, 16
        %s246 = scalar_lea.vmem [#allocation2], %s245
        %p247 = pneg %p45
        %p248 = pneg %p42
        %s249 = sand.u32 %s24, 1
        %s250 = scalar_lea.sflag [#allocation6], %s249
        %s251 = sand.u32 %s58, 1
        %s252 = smul.addr %s251, 8
        %s253 = scalar_lea.vmem [#allocation5], %s252
        %p254 = pneg %p71
        %p255 = pneg %p68
        %p256 = pneg %p92
        %p257 = pneg %p89
        %p258 = pneg %p113
        %p259 = pneg %p110
        %p260 = pneg %p139
        %p261 = pneg %p136
        %s262 = sand.u32 %s126, 1
        %s263 = scalar_lea.sflag [#allocation4], %s262
        %s264 = sand.u32 %s126, 1
        %s265 = smul.addr %s264, 8
        %s266 = scalar_lea.vmem [#allocation8], %s265
        %v267 = vld [vmem:[%s224] sm:$0xff]
        %v268 = vld [vmem:[%s224 + $0x8] sm:$0xff]
        %v269 = vld [vmem:[#allocation7] sm:$0xff]
        %v270 = vld [vmem:[#allocation7 + $0x8] sm:$0xff]
        %v271 = vld [vmem:[#allocation7 + $0x10] sm:$0xff]
        %v272 = vld [vmem:[#allocation7 + $0x18] sm:$0xff]
        %v273 = vld [vmem:[%s3] sm:$0x1]
        %v275 = vlaneseq
        %v276 = vshrl.u32 %v275, 7
        %v277 = vsub.s32 0, %v276
        %v278 = vrot.slane %v273, %v277
        %vm280 = vcmask 261120
        %v282 = vsel %vm280, %v267, 0
        %v285 = vsel %vm280, %v268, 0
        %287 = vmatprep.subr.mxu0 0.0
        %288 = vmatpush1.msra.mxu0 %v269
        %289 = vmatprep.subr.mxu0 0.0
        %290 = vmatpush1.msra.mxu0 %v270
        %291 = vmatprep.subr.mxu0 0.0
        %292 = vmatpush1.msra.mxu0 %v271
        %293 = vmatprep.subr.mxu0 0.0
        %294 = vmatpush1.msra.mxu0 %v272
        %295 = vmatprep.subr.mxu0 0.0
        %296 = vmatpush1.msra.mxu0 0.0
        %297 = vmatprep.subr.mxu0 0.0
        %298 = vmatpush1.msra.mxu0 0.0
        %299 = vmatprep.subr.mxu0 0.0
        %300 = vmatpush1.msra.mxu0 0.0
        %301 = vmatprep.subr.mxu0 0.0
        %302 = vmatpush1.msra.mxu0 0.0
        %303 = vmatprep.subr.mxu0 0.0
        %304 = vmatpush1.msra.mxu0 0.0
        %305 = vmatprep.subr.mxu0 0.0
        %306 = vmatpush1.msra.mxu0 0.0
        %307 = vmatprep.subr.mxu0 0.0
        %308 = vmatpush1.msra.mxu0 0.0
        %309 = vmatprep.subr.mxu0 0.0
        %310 = vmatpush1.msra.mxu0 0.0
        %311 = vmatprep.subr.mxu0 0.0
        %312 = vmatpush1.msra.mxu0 0.0
        %313 = vmatprep.subr.mxu0 0.0
        %314 = vmatpush1.msra.mxu0 0.0
        %315 = vmatprep.subr.mxu0 0.0
        %316 = vmatpush1.msra.mxu0 0.0
        %317 = vmatprep.subr.mxu0 0.0
        %318 = vmatpush1.msra.mxu0 0.0
        %319 = vmatprep.subr.mxu0 0.0
        %320 = vmatpush1.msra.mxu0 0.0
        %321 = vmatprep.subr.mxu0 0.0
        %322 = vmatpush1.msra.mxu0 0.0
        %323 = vmatprep.subr.mxu0 0.0
        %324 = vmatpush1.msra.mxu0 0.0
        %325 = vmatprep.subr.mxu0 0.0
        %326 = vmatpush1.msra.mxu0 0.0
        %327 = vmatprep.subr.mxu0 0.0
        %328 = vmatpush1.msra.mxu0 0.0
        %329 = vmatprep.subr.mxu0 0.0
        %330 = vmatpush1.msra.mxu0 0.0
        %331 = vmatprep.subr.mxu0 0.0
        %332 = vmatpush1.msra.mxu0 0.0
        %333 = vmatprep.subr.mxu0 0.0
        %334 = vmatpush1.msra.mxu0 0.0
        %335 = vmatprep.subr.mxu0 0.0
        %336 = vmatpush1.msra.mxu0 0.0
        %337 = vmatprep.subr.mxu0 0.0
        %338 = vmatpush1.msra.mxu0 0.0
        %339 = vmatprep.subr.mxu0 0.0
        %340 = vmatpush1.msra.mxu0 0.0
        %341 = vmatprep.subr.mxu0 0.0
        %342 = vmatpush1.msra.mxu0 0.0
        %343 = vmatprep.subr.mxu0 0.0
        %344 = vmatpush1.msra.mxu0 0.0
        %345 = vmatprep.subr.mxu0 0.0
        %346 = vmatpush1.msra.mxu0 0.0
        %347 = vmatprep.subr.mxu0 0.0
        %348 = vmatpush1.msra.mxu0 0.0
        %349 = vmatprep.subr.mxu0 0.0
        %350 = vmatpush1.msra.mxu0 0.0
        %351 = vmatprep.mubr.f32.mxu0 0.0
        %352 = vmatmul.mubr.f32.gmra.mrb[0].mxu0 %v282
        %v353 = vpop.f32.mrb[0].mxu0
        %v354 = vadd.f32 %v278, %v353
        %v355 = vpop.f32.mrb[0].mxu0
        %356 = vmatprep.mubr.f32.mxu0 0.0
        %357 = vmatmul.mubr.f32.gmra.mrb[0].mxu0 %v285
        %v358 = vpop.f32.mrb[0].mxu0
        %v359 = vadd.f32 %v278, %v358
        %v360 = vpop.f32.mrb[0].mxu0
        %361 = vdwg.mxu0
        %363 = vrot.lane.b32.xlu0 %v359, 96
        %v364 = vpop.permute.xlu0 %363
        %v366 = vsel %vm280, %v354, 0
        %v368 = vsel %vm280, %v364, 0
        %370 = vmatprep.subr.mxu0 0.0
        %371 = vmatpush1.xpose.msra.mxu0 %v368
        %372 = vmatprep.subr.mxu0 0.0
        %373 = vmatpush1.xpose.msra.mxu0 0.0
        %374 = vmatprep.subr.mxu0 0.0
        %375 = vmatpush1.xpose.msra.mxu0 0.0
        %376 = vmatprep.subr.mxu0 0.0
        %377 = vmatpush1.xpose.msra.mxu0 0.0
        %378 = vmatprep.subr.mxu0 0.0
        %379 = vmatpush1.xpose.msra.mxu0 0.0
        %380 = vmatprep.subr.mxu0 0.0
        %381 = vmatpush1.xpose.msra.mxu0 0.0
        %382 = vmatprep.subr.mxu0 0.0
        %383 = vmatpush1.xpose.msra.mxu0 0.0
        %384 = vmatprep.subr.mxu0 0.0
        %385 = vmatpush1.xpose.msra.mxu0 0.0
        %386 = vmatprep.subr.mxu0 0.0
        %387 = vmatpush1.xpose.msra.mxu0 0.0
        %388 = vmatprep.subr.mxu0 0.0
        %389 = vmatpush1.xpose.msra.mxu0 0.0
        %390 = vmatprep.subr.mxu0 0.0
        %391 = vmatpush1.xpose.msra.mxu0 0.0
        %392 = vmatprep.subr.mxu0 0.0
        %393 = vmatpush1.xpose.msra.mxu0 0.0
        %394 = vmatprep.subr.mxu0 0.0
        %395 = vmatpush1.xpose.msra.mxu0 0.0
        %396 = vmatprep.subr.mxu0 0.0
        %397 = vmatpush1.xpose.msra.mxu0 0.0
        %398 = vmatprep.subr.mxu0 0.0
        %399 = vmatpush1.xpose.msra.mxu0 0.0
        %400 = vmatprep.subr.mxu0 0.0
        %401 = vmatpush1.xpose.msra.mxu0 0.0
        %402 = vmatprep.subr.mxu0 0.0
        %403 = vmatpush1.xpose.msra.mxu0 0.0
        %404 = vmatprep.subr.mxu0 0.0
        %405 = vmatpush1.xpose.msra.mxu0 0.0
        %406 = vmatprep.subr.mxu0 0.0
        %407 = vmatpush1.xpose.msra.mxu0 0.0
        %408 = vmatprep.subr.mxu0 0.0
        %409 = vmatpush1.xpose.msra.mxu0 0.0
        %410 = vmatprep.subr.mxu0 0.0
        %411 = vmatpush1.xpose.msra.mxu0 0.0
        %412 = vmatprep.subr.mxu0 0.0
        %413 = vmatpush1.xpose.msra.mxu0 0.0
        %414 = vmatprep.subr.mxu0 0.0
        %415 = vmatpush1.xpose.msra.mxu0 0.0
        %416 = vmatprep.subr.mxu0 0.0
        %417 = vmatpush1.xpose.msra.mxu0 0.0
        %418 = vmatprep.subr.mxu0 0.0
        %419 = vmatpush1.xpose.msra.mxu0 0.0
        %420 = vmatprep.subr.mxu0 0.0
        %421 = vmatpush1.xpose.msra.mxu0 0.0
        %422 = vmatprep.subr.mxu0 0.0
        %423 = vmatpush1.xpose.msra.mxu0 0.0
        %424 = vmatprep.subr.mxu0 0.0
        %425 = vmatpush1.xpose.msra.mxu0 0.0
        %426 = vmatprep.subr.mxu0 0.0
        %427 = vmatpush1.xpose.msra.mxu0 0.0
        %428 = vmatprep.subr.mxu0 0.0
        %429 = vmatpush1.xpose.msra.mxu0 0.0
        %430 = vmatprep.subr.mxu0 0.0
        %431 = vmatpush1.xpose.msra.mxu0 0.0
        %432 = vmatprep.subr.mxu0 0.0
        %433 = vmatpush1.xpose.msra.mxu0 0.0
        %434 = vmatprep.mubr.f32.mxu0 0.0
        %435 = vmatmul.mubr.f32.gmra.mrb[0].mxu0 %v366
        %v436 = vpop.f32.mrb[0].mxu0
        %v437 = vadd.f32 0.0, %v436
        %v438 = vpop.f32.mrb[0].mxu0
        %439 = vdwg.mxu0
        %vm440 = vcmask 64512
        %v441 = vsel %vm440, %v437, -inf
        %442 = vmax.xlane.f32.xlu0 %v441
        %v443 = vpop.xlane.xlu0 %442
        %v444 = vsub.f32 %v437, %v443
        %v445 = vmul.f32 %v444, 1.442695
        %v446 = vpow.pop %v445
        %v447 = vsel %vm440, %v446, 0.0
        %448 = vadd.xlane.f32.xlu0 %v447
        %v449 = vpop.xlane.xlu0 %448
        %v450 = vrcp.pop %v449
        %v451 = vmul.f32 %v446, %v450
        %v452 = vld [vmem:[%s233] sm:$0xff]
        %v454 = vsel %vm440, %v451, 0
        %456 = vmatprep.subr.mxu0 0.0
        %457 = vmatpush1.msra.mxu0 %v452
        %458 = vmatprep.subr.mxu0 0.0
        %459 = vmatpush1.msra.mxu0 0.0
        %460 = vmatprep.subr.mxu0 0.0
        %461 = vmatpush1.msra.mxu0 0.0
        %462 = vmatprep.subr.mxu0 0.0
        %463 = vmatpush1.msra.mxu0 0.0
        %464 = vmatprep.subr.mxu0 0.0
        %465 = vmatpush1.msra.mxu0 0.0
        %466 = vmatprep.subr.mxu0 0.0
        %467 = vmatpush1.msra.mxu0 0.0
        %468 = vmatprep.subr.mxu0 0.0
        %469 = vmatpush1.msra.mxu0 0.0
        %470 = vmatprep.subr.mxu0 0.0
        %471 = vmatpush1.msra.mxu0 0.0
        %472 = vmatprep.subr.mxu0 0.0
        %473 = vmatpush1.msra.mxu0 0.0
        %474 = vmatprep.subr.mxu0 0.0
        %475 = vmatpush1.msra.mxu0 0.0
        %476 = vmatprep.subr.mxu0 0.0
        %477 = vmatpush1.msra.mxu0 0.0
        %478 = vmatprep.subr.mxu0 0.0
        %479 = vmatpush1.msra.mxu0 0.0
        %480 = vmatprep.subr.mxu0 0.0
        %481 = vmatpush1.msra.mxu0 0.0
        %482 = vmatprep.subr.mxu0 0.0
        %483 = vmatpush1.msra.mxu0 0.0
        %484 = vmatprep.subr.mxu0 0.0
        %485 = vmatpush1.msra.mxu0 0.0
        %486 = vmatprep.subr.mxu0 0.0
        %487 = vmatpush1.msra.mxu0 0.0
        %488 = vmatprep.subr.mxu0 0.0
        %489 = vmatpush1.msra.mxu0 0.0
        %490 = vmatprep.subr.mxu0 0.0
        %491 = vmatpush1.msra.mxu0 0.0
        %492 = vmatprep.subr.mxu0 0.0
        %493 = vmatpush1.msra.mxu0 0.0
        %494 = vmatprep.subr.mxu0 0.0
        %495 = vmatpush1.msra.mxu0 0.0
        %496 = vmatprep.subr.mxu0 0.0
        %497 = vmatpush1.msra.mxu0 0.0
        %498 = vmatprep.subr.mxu0 0.0
        %499 = vmatpush1.msra.mxu0 0.0
        %500 = vmatprep.subr.mxu0 0.0
        %501 = vmatpush1.msra.mxu0 0.0
        %502 = vmatprep.subr.mxu0 0.0
        %503 = vmatpush1.msra.mxu0 0.0
        %504 = vmatprep.subr.mxu0 0.0
        %505 = vmatpush1.msra.mxu0 0.0
        %506 = vmatprep.subr.mxu0 0.0
        %507 = vmatpush1.msra.mxu0 0.0
        %508 = vmatprep.subr.mxu0 0.0
        %509 = vmatpush1.msra.mxu0 0.0
        %510 = vmatprep.subr.mxu0 0.0
        %511 = vmatpush1.msra.mxu0 0.0
        %512 = vmatprep.subr.mxu0 0.0
        %513 = vmatpush1.msra.mxu0 0.0
        %514 = vmatprep.subr.mxu0 0.0
        %515 = vmatpush1.msra.mxu0 0.0
        %516 = vmatprep.subr.mxu0 0.0
        %517 = vmatpush1.msra.mxu0 0.0
        %518 = vmatprep.subr.mxu0 0.0
        %519 = vmatpush1.msra.mxu0 0.0
        %520 = vmatprep.mubr.f32.mxu0 0.0
        %521 = vmatmul.mubr.f32.gmra.mrb[0].mxu0 %v454
        %v522 = vpop.f32.mrb[0].mxu0
        %v523 = vadd.f32 0.0, %v522
        %v524 = vpop.f32.mrb[0].mxu0
        %525 = vdwg.mxu0
        %526 = vst.msk [vmem:[%s266] sm:$0xff] %vm280, %v523
        %s527 = sand.u32 %s126, 1
        %s528 = scalar_lea.sflag [#allocation4], %s527
        %s529 = sand.u32 %s126, 1
        %s530 = smul.addr %s529, 8
        %s531 = scalar_lea.vmem [#allocation8], %s530
        // Predicated region
        $region49: #{tpu_custom_call.1} parent=35 // pred_check
          %p532 = pneg %p136
        $region50: #{tpu_custom_call.1} parent=35 // pred_check_branch
          %534 = sbr.rel (%p532) target = $region52
        $region51: #{tpu_custom_call.1} parent=35 // pred_region
          %s536 = ssub.s32 128, 128
          %537 = vsyncadd %s528, %s536
          %s538 = smul.addr %s24, 128
          %s539 = scalar_lea.hbm %s4, %s538
          %s541 = sshll.u32 %s531, 4
          %s542 = int_to_ptr.vmem [resolvable:$true] %s541
          %544 = dma.vmem_to_hbm [thread:$0]  %s542, 128, %s539, %s528
        $region52: #{tpu_custom_call.1} parent=35 // pred_fallthru
          _
      $region36: #{tpu_custom_call.1} parent=5 // pred_fallthru
        _
      %p545 = scmp.le.s32.totalorder 2, %s19
      // Predicated region
      $region53: #{tpu_custom_call.1} parent=5 // pred_check
        %p546 = pneg %p545
      $region54: #{tpu_custom_call.1} parent=5 // pred_check_branch
        %548 = sbr.rel (%p546) target = $region56
      $region55: #{tpu_custom_call.1} parent=5 // pred_region
        %s549 = ssub.s32 %s19, 2
        // Predicated region
        $region57: #{tpu_custom_call.1} parent=55 // pred_check
          %p550 = pneg %p142
        $region58: #{tpu_custom_call.1} parent=55 // pred_check_branch
          %552 = sbr.rel (%p550) target = $region60
        $region59: #{tpu_custom_call.1} parent=55 // pred_region
          %s553 = sand.u32 %s127, 1
          %s554 = scalar_lea.sflag [#allocation4], %s553
          %s555 = sand.u32 %s127, 1
          %s556 = smul.addr %s555, 8
          %s557 = scalar_lea.vmem [#allocation8], %s556
          %558 = dma.done %s554, 128
        $region60: #{tpu_custom_call.1} parent=55 // pred_fallthru
          _
      $region56: #{tpu_custom_call.1} parent=5 // pred_fallthru
        _
    $region6: #{tpu_custom_call.1} parent=1 // loop_footer
      %s23 = sadd.s32 1, %s19
    $region7: #{tpu_custom_call.1} parent=1 // loop_footer_branch
      %18 = sbr.rel target = $region3
    $region8: #{tpu_custom_call.1} parent=1 // loop_exit
      _
    %559 = vsyncpa [#allocation3], 1
    %s560 = scalar_lea.sflag [#allocation3], 1
    %561 = vsyncpa %s560, 1
    %562 = vsyncpa [#allocation6], 1
    %s563 = scalar_lea.sflag [#allocation6], 1
    %564 = vsyncpa %s563, 1
    %565 = vsyncpa [#allocation4], 1
    %s566 = scalar_lea.sflag [#allocation4], 1
    %567 = vsyncpa %s566, 1

</llo_original>
